<compile_context>
chip_gen: v7x
topology: tpu7x:2x2x1
jax: 0.10.0
libtpu: 0.0.40
codegen_flags: <defaults>
</compile_context>

<pallas_src>
import functools

import jax
import jax.numpy as jnp
from jax.experimental import pallas as pl
from jax.experimental.pallas import tpu as pltpu

IN_DIM = 250
HID = 100
IN_PAD = 256     # 250 -> 256 (K axis of layer 1, lane-aligned)
HID_PAD = 128    # 100 -> 128 (one full 128-lane vreg / MXU tile)


def _round_up(n, m):
    return (n + m - 1) // m * m


def regression_kernel(x_ref, wtrunk_ref, whead_ref, bias_ref, out_ref):
    """One batch tile: 4x (Linear + ReLU) shared trunk + fused multi-task head.

    x_ref     : (tm, IN_PAD)                          f32
    wtrunk_ref: (IN_PAD + 3*HID_PAD, HID_PAD)         bf16, rows = [w1; w2; w3; w4]
    whead_ref : (HID_PAD, n_tasks*HID_PAD)            bf16 (all task heads fused)
    bias_ref  : (1, 4*HID_PAD + n_tasks*HID_PAD)      f32,  cols = [b1|b2|b3|b4|bt]
    out_ref   : (tm, n_tasks*HID_PAD)                 f32 (lane-dense slab)
    """
    # Static row offsets into the packed trunk slab (zero-cost static slices,
    # all boundaries sublane-aligned).
    r1 = IN_PAD
    r2 = r1 + HID_PAD
    r3 = r2 + HID_PAD
    r4 = r3 + HID_PAD

    w1 = wtrunk_ref[0:r1, :]
    w2 = wtrunk_ref[r1:r2, :]
    w3 = wtrunk_ref[r2:r3, :]
    w4 = wtrunk_ref[r3:r4, :]

    b1 = bias_ref[:, 0 * HID_PAD:1 * HID_PAD]
    b2 = bias_ref[:, 1 * HID_PAD:2 * HID_PAD]
    b3 = bias_ref[:, 2 * HID_PAD:3 * HID_PAD]
    b4 = bias_ref[:, 3 * HID_PAD:4 * HID_PAD]
    bt = bias_ref[:, 4 * HID_PAD:]

    def dense_relu(h, w, b):
        # bf16 x bf16 MXU matmul, f32 accumulation; bias add + ReLU on the VPU.
        z = jnp.dot(h.astype(jnp.bfloat16), w,
                    preferred_element_type=jnp.float32) + b
        return jnp.maximum(z, 0.0)

    h = dense_relu(x_ref[...], w1, b1)
    h = dense_relu(h, w2, b2)
    h = dense_relu(h, w3, b3)
    h = dense_relu(h, w4, b4)

    # All task heads in one (128, n_tasks*128) matmul -> single unmasked
    # lane-dense store of the whole output tile.
    out = jnp.dot(h.astype(jnp.bfloat16), whead_ref[...],
                  preferred_element_type=jnp.float32) + bt
    out_ref[...] = out.astype(out_ref.dtype)


@jax.jit
def regression_forward(x, wtrunk, whead, biases):
    """x: (B, 250) f32.  Packed/padded params from pack_params().
    Returns (B, n_tasks, 100) f32, matching torch.stack(outs, dim=1)."""
    B = x.shape[0]
    n_head = whead.shape[1]              # n_tasks * HID_PAD
    n_tasks = n_head // HID_PAD
    n_rows_w = IN_PAD + 3 * HID_PAD
    n_bias = 4 * HID_PAD + n_head

    # Batch tile: whole (small) batch in one shot; 512-row tiles for large B
    # (double-buffered, sharded across TensorCores via "parallel").
    tm = min(512, _round_up(B, 8))
    B_pad = _round_up(B, tm)

    # Zero-pad x to (B_pad, IN_PAD): lane/sublane aligned; zeros are ReLU-safe.
    x_p = jnp.zeros((B_pad, IN_PAD), jnp.float32).at[:B, :IN_DIM].set(x)

    flops = 2 * B_pad * (IN_PAD * HID_PAD + 3 * HID_PAD * HID_PAD
                         + HID_PAD * n_head)
    bytes_accessed = (x_p.size * 4 + wtrunk.size * 2 + whead.size * 2
                      + biases.size * 4 + B_pad * n_head * 4)

    out_flat = pl.pallas_call(
        regression_kernel,
        out_shape=jax.ShapeDtypeStruct((B_pad, n_head), jnp.float32),
        grid=(B_pad // tm,),
        in_specs=[
            pl.BlockSpec((tm, IN_PAD), lambda i: (i, 0)),
            pl.BlockSpec((n_rows_w, HID_PAD), lambda i: (0, 0)),   # VMEM-resident
            pl.BlockSpec((HID_PAD, n_head), lambda i: (0, 0)),     # VMEM-resident
            pl.BlockSpec((1, n_bias), lambda i: (0, 0)),           # VMEM-resident
        ],
        out_specs=pl.BlockSpec((tm, n_head), lambda i: (i, 0)),
        compiler_params=pltpu.CompilerParams(
            dimension_semantics=("parallel",)),
        cost_estimate=pl.CostEstimate(
            flops=flops, transcendentals=0, bytes_accessed=bytes_accessed),
    )(x_p, wtrunk, whead, biases)

    # (B_pad, n_tasks*128) -> (B, n_tasks, 100).  The reshape is metadata-only;
    # the slices drop the zero padding.
    return out_flat.reshape(B_pad, n_tasks, HID_PAD)[:B, :, :HID]


def pack_params(w1, b1, w2, b2, w3, b3, w4, b4, wt, bt):
    """Zero-pad to (8,128)-aligned tiles and pack into 3 slabs.

    Inputs (JAX layout): w* (fan_in, fan_out) f32, b* (fan_out,) f32,
    wt (n_tasks, 100, 100), bt (n_tasks, 100).
    Returns: wtrunk (640,128) bf16, whead (128, n_tasks*128) bf16,
             biases (1, 4*128 + n_tasks*128) f32.
    """
    n_tasks = wt.shape[0]

    def pad2(w, r, c):
        return jnp.zeros((r, c), jnp.float32).at[:w.shape[0], :w.shape[1]].set(w)

    def padb(b, c):
        return jnp.zeros((c,), jnp.float32).at[:b.shape[0]].set(b)

    w1p = pad2(w1, IN_PAD, HID_PAD)
    w2p = pad2(w2, HID_PAD, HID_PAD)
    w3p = pad2(w3, HID_PAD, HID_PAD)
    w4p = pad2(w4, HID_PAD, HID_PAD)
    wtrunk = jnp.concatenate([w1p, w2p, w3p, w4p], axis=0).astype(jnp.bfloat16)

    wtp = jnp.zeros((n_tasks, HID_PAD, HID_PAD),
                    jnp.float32).at[:, :HID, :HID].set(wt)
    # (n_tasks, 128, 128) -> (128, n_tasks*128): fused, lane-dense head.
    whead = jnp.transpose(wtp, (1, 0, 2)).reshape(
        HID_PAD, n_tasks * HID_PAD).astype(jnp.bfloat16)

    btp = jnp.zeros((n_tasks, HID_PAD), jnp.float32).at[:, :HID].set(bt)
    biases = jnp.concatenate(
        [padb(b1, HID_PAD), padb(b2, HID_PAD), padb(b3, HID_PAD),
         padb(b4, HID_PAD), btp.reshape(n_tasks * HID_PAD)], axis=0)[None, :]

    return wtrunk, whead, biases


def init_linear(key, fan_in, fan_out):
    """PyTorch nn.Linear default init: U(-1/sqrt(fan_in), 1/sqrt(fan_in)).
    Weight already transposed to (fan_in, fan_out)."""
    kw, kb = jax.random.split(key)
    bound = 1.0 / jnp.sqrt(jnp.float32(fan_in))
    w = jax.random.uniform(kw, (fan_in, fan_out), jnp.float32, -bound, bound)
    b = jax.random.uniform(kb, (fan_out,), jnp.float32, -bound, bound)
    return w, b


if __name__ == "__main__":
    n_tasks = 3
    B = 8

    key = jax.random.PRNGKey(0)
    keys = jax.random.split(key, 5 + n_tasks)

    x = jax.random.normal(keys[0], (B, IN_DIM), jnp.float32)

    w1, b1 = init_linear(keys[1], IN_DIM, HID)
    w2, b2 = init_linear(keys[2], HID, HID)
    w3, b3 = init_linear(keys[3], HID, HID)
    w4, b4 = init_linear(keys[4], HID, HID)

    wt_list, bt_list = [], []
    for i in range(n_tasks):
        w, b = init_linear(keys[5 + i], HID, HID)
        wt_list.append(w)
        bt_list.append(b)
    wt = jnp.stack(wt_list, axis=0)   # (n_tasks, 100, 100)
    bt = jnp.stack(bt_list, axis=0)   # (n_tasks, 100)

    wtrunk, whead, biases = pack_params(w1, b1, w2, b2, w3, b3, w4, b4, wt, bt)

    out = regression_forward(x, wtrunk, whead, biases)
    out = jax.block_until_ready(out)
    assert out.shape == (B, n_tasks, HID), out.shape

    # Reference 1: identical math to the kernel (bf16 weights + activations,
    # f32 accumulation) in pure JAX -> tight tolerance.
    def bf16_dense(h, w, b):
        return jnp.dot(h.astype(jnp.bfloat16), w.astype(jnp.bfloat16),
                       preferred_element_type=jnp.float32) + b

    h = jax.nn.relu(bf16_dense(x, w1, b1))
    h = jax.nn.relu(bf16_dense(h, w2, b2))
    h = jax.nn.relu(bf16_dense(h, w3, b3))
    h = jax.nn.relu(bf16_dense(h, w4, b4))
    ref_q = jnp.stack([bf16_dense(h, wt[i], bt[i]) for i in range(n_tasks)],
                      axis=1)
    assert jnp.allclose(out, ref_q, atol=1e-3, rtol=1e-3), \
        float(jnp.max(jnp.abs(out - ref_q)))

    # Reference 2: full-f32 forward (PyTorch semantics); loose tolerance covers
    # the bf16 weight quantization.
    h = jax.nn.relu(x @ w1 + b1)
    h = jax.nn.relu(h @ w2 + b2)
    h = jax.nn.relu(h @ w3 + b3)
    h = jax.nn.relu(h @ w4 + b4)
    ref = jnp.stack([h @ wt[i] + bt[i] for i in range(n_tasks)], axis=1)
    assert jnp.allclose(out, ref, atol=5e-2, rtol=5e-2), \
        float(jnp.max(jnp.abs(out - ref)))

    print("KERNEL_OK")
</pallas_src>

<mosaic_0001>
module attributes {stable_mosaic.version = 11 : i64} {
  func.func @regression_kernel(%arg0: i32, %arg1: memref<8x256xf32, #tpu.memory_space<vmem>>, %arg2: memref<640x128xbf16, #tpu.memory_space<vmem>>, %arg3: memref<128x384xbf16, #tpu.memory_space<vmem>>, %arg4: memref<1x896xf32, #tpu.memory_space<vmem>>, %arg5: memref<8x384xf32, #tpu.memory_space<vmem>>) attributes {dimension_semantics = [#tpu.dimension_semantics<parallel>], iteration_bounds = array<i64: 1>, scalar_prefetch = 0 : i64, scratch_operands = 0 : i64, tpu.core_type = #tpu.core_type<tc>, window_params = [{transform_indices = @transform_0, window_bounds = array<i64: 8, 256>}, {pipeline_mode = #tpu.pipeline_mode<synchronous>, transform_indices = @transform_1, window_bounds = array<i64: 640, 128>}, {pipeline_mode = #tpu.pipeline_mode<synchronous>, transform_indices = @transform_2, window_bounds = array<i64: 128, 384>}, {pipeline_mode = #tpu.pipeline_mode<synchronous>, transform_indices = @transform_3, window_bounds = array<i64: 1, 896>}, {transform_indices = @transform_4, window_bounds = array<i64: 8, 384>}]} {
    %c0 = arith.constant 0 : index
    %c0_0 = arith.constant 0 : index
    %0 = vector.load %arg2[%c0, %c0_0] : memref<640x128xbf16, #tpu.memory_space<vmem>>, vector<256x128xbf16>
    %c256 = arith.constant 256 : index
    %c0_1 = arith.constant 0 : index
    %1 = vector.load %arg2[%c256, %c0_1] : memref<640x128xbf16, #tpu.memory_space<vmem>>, vector<128x128xbf16>
    %c384 = arith.constant 384 : index
    %c0_2 = arith.constant 0 : index
    %2 = vector.load %arg2[%c384, %c0_2] : memref<640x128xbf16, #tpu.memory_space<vmem>>, vector<128x128xbf16>
    %c512 = arith.constant 512 : index
    %c0_3 = arith.constant 0 : index
    %3 = vector.load %arg2[%c512, %c0_3] : memref<640x128xbf16, #tpu.memory_space<vmem>>, vector<128x128xbf16>
    %c0_4 = arith.constant 0 : index
    %c0_5 = arith.constant 0 : index
    %4 = vector.load %arg4[%c0_4, %c0_5] : memref<1x896xf32, #tpu.memory_space<vmem>>, vector<1x128xf32>
    %c0_6 = arith.constant 0 : index
    %c128 = arith.constant 128 : index
    %5 = vector.load %arg4[%c0_6, %c128] : memref<1x896xf32, #tpu.memory_space<vmem>>, vector<1x128xf32>
    %c0_7 = arith.constant 0 : index
    %c256_8 = arith.constant 256 : index
    %6 = vector.load %arg4[%c0_7, %c256_8] : memref<1x896xf32, #tpu.memory_space<vmem>>, vector<1x128xf32>
    %c0_9 = arith.constant 0 : index
    %c384_10 = arith.constant 384 : index
    %7 = vector.load %arg4[%c0_9, %c384_10] : memref<1x896xf32, #tpu.memory_space<vmem>>, vector<1x128xf32>
    %c0_11 = arith.constant 0 : index
    %c512_12 = arith.constant 512 : index
    %8 = vector.load %arg4[%c0_11, %c512_12] : memref<1x896xf32, #tpu.memory_space<vmem>>, vector<1x384xf32>
    %c0_13 = arith.constant 0 : index
    %c0_14 = arith.constant 0 : index
    %9 = vector.load %arg1[%c0_13, %c0_14] : memref<8x256xf32, #tpu.memory_space<vmem>>, vector<8x256xf32>
    %10 = arith.truncf %9 : vector<8x256xf32> to vector<8x256xbf16>
    %cst = arith.constant dense<0.000000e+00> : vector<8x128xf32>
    %11 = tpu.matmul %10, %0, %cst {dimension_numbers = #tpu.dot_dimension_numbers<[1], [0], [0], [1], [0, 0, 1, 1], [], []>} : vector<8x256xbf16>, vector<256x128xbf16>, vector<8x128xf32> -> vector<8x128xf32>
    %12 = vector.broadcast %4 : vector<1x128xf32> to vector<8x128xf32>
    %13 = arith.addf %11, %12 : vector<8x128xf32>
    %cst_15 = arith.constant 0.000000e+00 : f32
    %14 = vector.broadcast %cst_15 : f32 to vector<8x128xf32>
    %15 = arith.maximumf %13, %14 : vector<8x128xf32>
    %16 = arith.truncf %15 : vector<8x128xf32> to vector<8x128xbf16>
    %cst_16 = arith.constant dense<0.000000e+00> : vector<8x128xf32>
    %17 = tpu.matmul %16, %1, %cst_16 {dimension_numbers = #tpu.dot_dimension_numbers<[1], [0], [0], [1], [0, 0, 1, 1], [], []>} : vector<8x128xbf16>, vector<128x128xbf16>, vector<8x128xf32> -> vector<8x128xf32>
    %18 = vector.broadcast %5 : vector<1x128xf32> to vector<8x128xf32>
    %19 = arith.addf %17, %18 : vector<8x128xf32>
    %cst_17 = arith.constant 0.000000e+00 : f32
    %20 = vector.broadcast %cst_17 : f32 to vector<8x128xf32>
    %21 = arith.maximumf %19, %20 : vector<8x128xf32>
    %22 = arith.truncf %21 : vector<8x128xf32> to vector<8x128xbf16>
    %cst_18 = arith.constant dense<0.000000e+00> : vector<8x128xf32>
    %23 = tpu.matmul %22, %2, %cst_18 {dimension_numbers = #tpu.dot_dimension_numbers<[1], [0], [0], [1], [0, 0, 1, 1], [], []>} : vector<8x128xbf16>, vector<128x128xbf16>, vector<8x128xf32> -> vector<8x128xf32>
    %24 = vector.broadcast %6 : vector<1x128xf32> to vector<8x128xf32>
    %25 = arith.addf %23, %24 : vector<8x128xf32>
    %cst_19 = arith.constant 0.000000e+00 : f32
    %26 = vector.broadcast %cst_19 : f32 to vector<8x128xf32>
    %27 = arith.maximumf %25, %26 : vector<8x128xf32>
    %28 = arith.truncf %27 : vector<8x128xf32> to vector<8x128xbf16>
    %cst_20 = arith.constant dense<0.000000e+00> : vector<8x128xf32>
    %29 = tpu.matmul %28, %3, %cst_20 {dimension_numbers = #tpu.dot_dimension_numbers<[1], [0], [0], [1], [0, 0, 1, 1], [], []>} : vector<8x128xbf16>, vector<128x128xbf16>, vector<8x128xf32> -> vector<8x128xf32>
    %30 = vector.broadcast %7 : vector<1x128xf32> to vector<8x128xf32>
    %31 = arith.addf %29, %30 : vector<8x128xf32>
    %cst_21 = arith.constant 0.000000e+00 : f32
    %32 = vector.broadcast %cst_21 : f32 to vector<8x128xf32>
    %33 = arith.maximumf %31, %32 : vector<8x128xf32>
    %34 = arith.truncf %33 : vector<8x128xf32> to vector<8x128xbf16>
    %c0_22 = arith.constant 0 : index
    %c0_23 = arith.constant 0 : index
    %35 = vector.load %arg3[%c0_22, %c0_23] : memref<128x384xbf16, #tpu.memory_space<vmem>>, vector<128x384xbf16>
    %cst_24 = arith.constant dense<0.000000e+00> : vector<8x384xf32>
    %36 = tpu.matmul %34, %35, %cst_24 {dimension_numbers = #tpu.dot_dimension_numbers<[1], [0], [0], [1], [0, 0, 1, 1], [], []>} : vector<8x128xbf16>, vector<128x384xbf16>, vector<8x384xf32> -> vector<8x384xf32>
    %37 = vector.broadcast %8 : vector<1x384xf32> to vector<8x384xf32>
    %38 = arith.addf %36, %37 : vector<8x384xf32>
    %c0_25 = arith.constant 0 : index
    %c0_26 = arith.constant 0 : index
    %39 = vector.load %arg5[%c0_25, %c0_26] : memref<8x384xf32, #tpu.memory_space<vmem>>, vector<8x384xf32>
    tpu.vector_store %arg5[%c0_25, %c0_26], %38 {strides = array<i32>} : memref<8x384xf32, #tpu.memory_space<vmem>>, vector<8x384xf32>,
    return
  }
  func.func @transform_0(%arg0: i32) -> (i32, i32) {
    %c0_i32 = arith.constant 0 : i32
    %c0_i32_0 = arith.constant 0 : i32
    return %arg0, %c0_i32 : i32, i32
  }
  func.func @transform_1(%arg0: i32) -> (i32, i32) {
    %c0_i32 = arith.constant 0 : i32
    %c0_i32_0 = arith.constant 0 : i32
    %c0_i32_1 = arith.constant 0 : i32
    return %c0_i32, %c0_i32_0 : i32, i32
  }
  func.func @transform_2(%arg0: i32) -> (i32, i32) {
    %c0_i32 = arith.constant 0 : i32
    %c0_i32_0 = arith.constant 0 : i32
    %c0_i32_1 = arith.constant 0 : i32
    return %c0_i32, %c0_i32_0 : i32, i32
  }
  func.func @transform_3(%arg0: i32) -> (i32, i32) {
    %c0_i32 = arith.constant 0 : i32
    %c0_i32_0 = arith.constant 0 : i32
    %c0_i32_1 = arith.constant 0 : i32
    return %c0_i32, %c0_i32_0 : i32, i32
  }
  func.func @transform_4(%arg0: i32) -> (i32, i32) {
    %c0_i32 = arith.constant 0 : i32
    %c0_i32_0 = arith.constant 0 : i32
    return %arg0, %c0_i32 : i32, i32
  }
}

</mosaic_0001>

<llo_original>
// kernel: regression_forward.1
$region0: #{regression_forward.1}
  #allocation0 [shape = 'u32[]', space=smem, size = 0x4, offset = 0x4, fixed_abs, tag = 'smem constant byte address 0x4 - core index']
  #allocation1 [shape = 'u32[144,128]{1,0:T(1,128)}', space=vmem, size = 0x12000, scoped, tag = 'internal scratch']
  %s0 = inlined_call_operand.vmem [shape: f32[8,256], index: 0, kind: input, shape index: {}]
  %s1 = inlined_call_operand.hbm [shape: bf16[640,128], index: 1, kind: input, shape index: {}]
  %s2 = inlined_call_operand.hbm [shape: bf16[128,384], index: 2, kind: input, shape index: {}]
  %s3 = inlined_call_operand.vmem [shape: f32[1,896], index: 3, kind: input, shape index: {}]
  %s4 = inlined_call_operand.hbm [shape: f32[8,384], index: 4, kind: output, shape index: {}]
  %s5 = sld [smem:[#allocation0]]
  $region34: #{regression_forward.1} parent=0
    _
  %s7 = ssub.s32 1, %s5
  %s8 = scalar_select 0, %s7, %s5
  $region1: #{regression_forward.1} parent=0
    #allocation2 [shape = 'u8[163840]{0}', space=vmem, size = 0x28000, scoped, tag = 'input window, operand 1, single buffered']
    #allocation3 [shape = 's32[1]{0}', space=sflag, size = 0x4, scoped, tag = 'scoped memory for regression_forward.1']
    #allocation4 [shape = 's32[1]{0}', space=sflag, size = 0x4, scoped, tag = 'scoped memory for regression_forward.1']
    #allocation5 [shape = 'u8[98304]{0}', space=vmem, size = 0x18000, scoped, tag = 'input window, operand 2, single buffered']
    #allocation6 [shape = 's32[1]{0}', space=sflag, size = 0x4, scoped, tag = 'scoped memory for regression_forward.1']
    #allocation7 [shape = 'u8[12288]{0}', space=vmem, size = 0x3000, scoped, tag = 'output window, operand 0, single buffered']
    %9 = vsyncpa [#allocation3], 0
    %10 = vsyncpa [#allocation6], 0
    %11 = vsyncpa [#allocation4], 0
    // Predicated region
    $region2: #{regression_forward.1} parent=1 // pred_check
      _
    $region3: #{regression_forward.1} parent=1 // pred_check_branch
      %13 = sbr.rel (0) target = $region5
    $region4: #{regression_forward.1} parent=1 // pred_region
      _
    $region5: #{regression_forward.1} parent=1 // pred_fallthru
      _
    // Predicated region
    $region6: #{regression_forward.1} parent=1 // pred_check
      _
    $region7: #{regression_forward.1} parent=1 // pred_check_branch
      %15 = sbr.rel (0) target = $region9
    $region8: #{regression_forward.1} parent=1 // pred_region
      %s17 = ssub.s32 5120, 5120
      %18 = vsyncadd [#allocation3], %s17
      %s19 = sshll.u32 [#allocation2], 4
      %s20 = int_to_ptr.vmem [resolvable:$true] %s19
      %25 = dma.hbm_to_vmem [thread:$0]  %s1, 5120, %s20, [#allocation3], 64, 64, 4
    $region9: #{regression_forward.1} parent=1 // pred_fallthru
      _
    // Predicated region
    $region10: #{regression_forward.1} parent=1 // pred_check
      _
    $region11: #{regression_forward.1} parent=1 // pred_check_branch
      %27 = sbr.rel (0) target = $region13
    $region12: #{regression_forward.1} parent=1 // pred_region
      %s29 = ssub.s32 3072, 3072
      %30 = vsyncadd [#allocation6], %s29
      %s31 = sshll.u32 [#allocation5], 4
      %s32 = int_to_ptr.vmem [resolvable:$true] %s31
      %37 = dma.hbm_to_vmem [thread:$0]  %s2, 3072, %s32, [#allocation6], 192, 192, 12
    $region13: #{regression_forward.1} parent=1 // pred_fallthru
      _
    // Predicated region
    $region14: #{regression_forward.1} parent=1 // pred_check
      _
    $region15: #{regression_forward.1} parent=1 // pred_check_branch
      %39 = sbr.rel (0) target = $region17
    $region16: #{regression_forward.1} parent=1 // pred_region
      _
    $region17: #{regression_forward.1} parent=1 // pred_fallthru
      _
    // Predicated region
    $region18: #{regression_forward.1} parent=1 // pred_check
      _
    $region19: #{regression_forward.1} parent=1 // pred_check_branch
      %41 = sbr.rel (0) target = $region21
    $region20: #{regression_forward.1} parent=1 // pred_region
      %42 = dma.done [#allocation3], 5120
    $region21: #{regression_forward.1} parent=1 // pred_fallthru
      _
    // Predicated region
    $region22: #{regression_forward.1} parent=1 // pred_check
      _
    $region23: #{regression_forward.1} parent=1 // pred_check_branch
      %44 = sbr.rel (0) target = $region25
    $region24: #{regression_forward.1} parent=1 // pred_region
      %45 = dma.done [#allocation6], 3072
    $region25: #{regression_forward.1} parent=1 // pred_fallthru
      _
    %v47 = vld [vmem:[#allocation2] sm:$0xf]
    %v48 = vld [vmem:[#allocation2 + $0x4] sm:$0xf]
    %v49 = vld [vmem:[#allocation2 + $0x8] sm:$0xf]
    %v50 = vld [vmem:[#allocation2 + $0xc] sm:$0xf]
    %v51 = vld [vmem:[#allocation2 + $0x10] sm:$0xf]
    %v52 = vld [vmem:[#allocation2 + $0x14] sm:$0xf]
    %v53 = vld [vmem:[#allocation2 + $0x18] sm:$0xf]
    %v54 = vld [vmem:[#allocation2 + $0x1c] sm:$0xf]
    %v55 = vld [vmem:[#allocation2 + $0x20] sm:$0xf]
    %v56 = vld [vmem:[#allocation2 + $0x24] sm:$0xf]
    %v57 = vld [vmem:[#allocation2 + $0x28] sm:$0xf]
    %v58 = vld [vmem:[#allocation2 + $0x2c] sm:$0xf]
    %v59 = vld [vmem:[#allocation2 + $0x30] sm:$0xf]
    %v60 = vld [vmem:[#allocation2 + $0x34] sm:$0xf]
    %v61 = vld [vmem:[#allocation2 + $0x38] sm:$0xf]
    %v62 = vld [vmem:[#allocation2 + $0x3c] sm:$0xf]
    %v63 = vld [vmem:[#allocation2 + $0x40] sm:$0xf]
    %v64 = vld [vmem:[#allocation2 + $0x44] sm:$0xf]
    %v65 = vld [vmem:[#allocation2 + $0x48] sm:$0xf]
    %v66 = vld [vmem:[#allocation2 + $0x4c] sm:$0xf]
    %v67 = vld [vmem:[#allocation2 + $0x50] sm:$0xf]
    %v68 = vld [vmem:[#allocation2 + $0x54] sm:$0xf]
    %v69 = vld [vmem:[#allocation2 + $0x58] sm:$0xf]
    %v70 = vld [vmem:[#allocation2 + $0x5c] sm:$0xf]
    %v71 = vld [vmem:[#allocation2 + $0x60] sm:$0xf]
    %v72 = vld [vmem:[#allocation2 + $0x64] sm:$0xf]
    %v73 = vld [vmem:[#allocation2 + $0x68] sm:$0xf]
    %v74 = vld [vmem:[#allocation2 + $0x6c] sm:$0xf]
    %v75 = vld [vmem:[#allocation2 + $0x70] sm:$0xf]
    %v76 = vld [vmem:[#allocation2 + $0x74] sm:$0xf]
    %v77 = vld [vmem:[#allocation2 + $0x78] sm:$0xf]
    %v78 = vld [vmem:[#allocation2 + $0x7c] sm:$0xf]
    %v79 = vld [vmem:[#allocation2 + $0x80] sm:$0xf]
    %v80 = vld [vmem:[#allocation2 + $0x84] sm:$0xf]
    %v81 = vld [vmem:[#allocation2 + $0x88] sm:$0xf]
    %v82 = vld [vmem:[#allocation2 + $0x8c] sm:$0xf]
    %v83 = vld [vmem:[#allocation2 + $0x90] sm:$0xf]
    %v84 = vld [vmem:[#allocation2 + $0x94] sm:$0xf]
    %v85 = vld [vmem:[#allocation2 + $0x98] sm:$0xf]
    %v86 = vld [vmem:[#allocation2 + $0x9c] sm:$0xf]
    %v87 = vld [vmem:[#allocation2 + $0xa0] sm:$0xf]
    %v88 = vld [vmem:[#allocation2 + $0xa4] sm:$0xf]
    %v89 = vld [vmem:[#allocation2 + $0xa8] sm:$0xf]
    %v90 = vld [vmem:[#allocation2 + $0xac] sm:$0xf]
    %v91 = vld [vmem:[#allocation2 + $0xb0] sm:$0xf]
    %v92 = vld [vmem:[#allocation2 + $0xb4] sm:$0xf]
    %v93 = vld [vmem:[#allocation2 + $0xb8] sm:$0xf]
    %v94 = vld [vmem:[#allocation2 + $0xbc] sm:$0xf]
    %v95 = vld [vmem:[#allocation2 + $0xc0] sm:$0xf]
    %v96 = vld [vmem:[#allocation2 + $0xc4] sm:$0xf]
    %v97 = vld [vmem:[#allocation2 + $0xc8] sm:$0xf]
    %v98 = vld [vmem:[#allocation2 + $0xcc] sm:$0xf]
    %v99 = vld [vmem:[#allocation2 + $0xd0] sm:$0xf]
    %v100 = vld [vmem:[#allocation2 + $0xd4] sm:$0xf]
    %v101 = vld [vmem:[#allocation2 + $0xd8] sm:$0xf]
    %v102 = vld [vmem:[#allocation2 + $0xdc] sm:$0xf]
    %v103 = vld [vmem:[#allocation2 + $0xe0] sm:$0xf]
    %v104 = vld [vmem:[#allocation2 + $0xe4] sm:$0xf]
    %v105 = vld [vmem:[#allocation2 + $0xe8] sm:$0xf]
    %v106 = vld [vmem:[#allocation2 + $0xec] sm:$0xf]
    %v107 = vld [vmem:[#allocation2 + $0xf0] sm:$0xf]
    %v108 = vld [vmem:[#allocation2 + $0xf4] sm:$0xf]
    %v109 = vld [vmem:[#allocation2 + $0xf8] sm:$0xf]
    %v110 = vld [vmem:[#allocation2 + $0xfc] sm:$0xf]
    %v111 = vld [vmem:[#allocation2 + $0x100] sm:$0xf]
    %v112 = vld [vmem:[#allocation2 + $0x104] sm:$0xf]
    %v113 = vld [vmem:[#allocation2 + $0x108] sm:$0xf]
    %v114 = vld [vmem:[#allocation2 + $0x10c] sm:$0xf]
    %v115 = vld [vmem:[#allocation2 + $0x110] sm:$0xf]
    %v116 = vld [vmem:[#allocation2 + $0x114] sm:$0xf]
    %v117 = vld [vmem:[#allocation2 + $0x118] sm:$0xf]
    %v118 = vld [vmem:[#allocation2 + $0x11c] sm:$0xf]
    %v119 = vld [vmem:[#allocation2 + $0x120] sm:$0xf]
    %v120 = vld [vmem:[#allocation2 + $0x124] sm:$0xf]
    %v121 = vld [vmem:[#allocation2 + $0x128] sm:$0xf]
    %v122 = vld [vmem:[#allocation2 + $0x12c] sm:$0xf]
    %v123 = vld [vmem:[#allocation2 + $0x130] sm:$0xf]
    %v124 = vld [vmem:[#allocation2 + $0x134] sm:$0xf]
    %v125 = vld [vmem:[#allocation2 + $0x138] sm:$0xf]
    %v126 = vld [vmem:[#allocation2 + $0x13c] sm:$0xf]
    %v127 = vld [vmem:[%s3] sm:$0x1]
    %v128 = vld [vmem:[%s3 + $0x1] sm:$0x1]
    %v129 = vld [vmem:[%s3 + $0x2] sm:$0x1]
    %v130 = vld [vmem:[%s3 + $0x3] sm:$0x1]
    %v131 = vld [vmem:[%s3 + $0x4] sm:$0x7]
    %v132 = vld [vmem:[%s0] sm:$0xff]
    %v133 = vld [vmem:[%s0 + $0x8] sm:$0xff]
    %v134 = vpack.c.bf16 %v132, %v132
    %v135 = vpack.c.bf16 %v133, %v133
    %v137 = vlaneseq
    %v138 = vshrl.u32 %v137, 7
    %v139 = vsub.s32 0, %v138
    %v140 = vrot.slane %v127, %v139
    %v174 = vunpack.c.l.b16 %v47
    %v175 = vunpack.c.l.b16 %v48
    %v176 = vunpack.c.l.b16 %v49
    %v177 = vunpack.c.l.b16 %v50
    %v178 = vunpack.c.l.b16 %v51
    %v179 = vunpack.c.l.b16 %v52
    %v180 = vunpack.c.l.b16 %v53
    %v181 = vunpack.c.l.b16 %v54
    %v182 = vunpack.c.l.b16 %v55
    %v183 = vunpack.c.l.b16 %v56
    %v184 = vunpack.c.l.b16 %v57
    %v185 = vunpack.c.l.b16 %v58
    %v186 = vunpack.c.l.b16 %v59
    %v187 = vunpack.c.l.b16 %v60
    %v188 = vunpack.c.l.b16 %v61
    %v189 = vunpack.c.l.b16 %v62
    %v190 = vunpack.c.l.b16 %v63
    %v191 = vunpack.c.l.b16 %v64
    %v192 = vunpack.c.l.b16 %v65
    %v193 = vunpack.c.l.b16 %v66
    %v194 = vunpack.c.l.b16 %v67
    %v195 = vunpack.c.l.b16 %v68
    %v196 = vunpack.c.l.b16 %v69
    %v197 = vunpack.c.l.b16 %v70
    %v198 = vunpack.c.l.b16 %v71
    %v199 = vunpack.c.l.b16 %v72
    %v200 = vunpack.c.l.b16 %v73
    %v201 = vunpack.c.l.b16 %v74
    %v202 = vunpack.c.l.b16 %v75
    %v203 = vunpack.c.l.b16 %v76
    %v204 = vunpack.c.l.b16 %v77
    %v205 = vunpack.c.l.b16 %v78
    %v206 = vpack.c.b16 %v175, %v174
    %v207 = vpack.c.b16 %v177, %v176
    %v208 = vpack.c.b16 %v179, %v178
    %v209 = vpack.c.b16 %v181, %v180
    %v210 = vpack.c.b16 %v183, %v182
    %v211 = vpack.c.b16 %v185, %v184
    %v212 = vpack.c.b16 %v187, %v186
    %v213 = vpack.c.b16 %v189, %v188
    %v214 = vpack.c.b16 %v191, %v190
    %v215 = vpack.c.b16 %v193, %v192
    %v216 = vpack.c.b16 %v195, %v194
    %v217 = vpack.c.b16 %v197, %v196
    %v218 = vpack.c.b16 %v199, %v198
    %v219 = vpack.c.b16 %v201, %v200
    %v220 = vpack.c.b16 %v203, %v202
    %v221 = vpack.c.b16 %v205, %v204
    %238 = vmatprep.subr.bf16.mxu0 0
    %239 = vmatpush1.bf16.msra.mxu0 %v206
    %240 = vmatprep.subr.bf16.mxu0 0
    %241 = vmatpush1.bf16.msra.mxu0 %v207
    %242 = vmatprep.subr.bf16.mxu0 0
    %243 = vmatpush1.bf16.msra.mxu0 %v208
    %244 = vmatprep.subr.bf16.mxu0 0
    %245 = vmatpush1.bf16.msra.mxu0 %v209
    %246 = vmatprep.subr.bf16.mxu0 0
    %247 = vmatpush1.bf16.msra.mxu0 %v210
    %248 = vmatprep.subr.bf16.mxu0 0
    %249 = vmatpush1.bf16.msra.mxu0 %v211
    %250 = vmatprep.subr.bf16.mxu0 0
    %251 = vmatpush1.bf16.msra.mxu0 %v212
    %252 = vmatprep.subr.bf16.mxu0 0
    %253 = vmatpush1.bf16.msra.mxu0 %v213
    %254 = vmatprep.subr.bf16.mxu0 0
    %255 = vmatpush1.bf16.msra.mxu0 %v214
    %256 = vmatprep.subr.bf16.mxu0 0
    %257 = vmatpush1.bf16.msra.mxu0 %v215
    %258 = vmatprep.subr.bf16.mxu0 0
    %259 = vmatpush1.bf16.msra.mxu0 %v216
    %260 = vmatprep.subr.bf16.mxu0 0
    %261 = vmatpush1.bf16.msra.mxu0 %v217
    %262 = vmatprep.subr.bf16.mxu0 0
    %263 = vmatpush1.bf16.msra.mxu0 %v218
    %264 = vmatprep.subr.bf16.mxu0 0
    %265 = vmatpush1.bf16.msra.mxu0 %v219
    %266 = vmatprep.subr.bf16.mxu0 0
    %267 = vmatpush1.bf16.msra.mxu0 %v220
    %268 = vmatprep.subr.bf16.mxu0 0
    %269 = vmatpush1.bf16.msra.mxu0 %v221
    %270 = vmatprep.mubr.bf16.mxu0 %v135
    %271 = vmatmul.mubr.bf16.gmra.mrb[0].mxu0 %v134
    %v272 = vpop.f32.mrb[0].mxu0
    %v273 = vadd.f32 %v140, %v272
    %v274 = vpop.f32.mrb[0].mxu0
    %v275 = vpop.f32.mrb[0].mxu0
    %v276 = vpop.f32.mrb[0].mxu0
    %277 = vdwg.mxu0
    %v278 = vmax.f32 %v273, 0.0
    %v279 = vpack.c.bf16 %v278, %v278
    %v281 = vlaneseq
    %v282 = vshrl.u32 %v281, 7
    %v283 = vsub.s32 0, %v282
    %v284 = vrot.slane %v128, %v283
    %v302 = vunpack.c.l.b16 %v79
    %v303 = vunpack.c.l.b16 %v80
    %v304 = vunpack.c.l.b16 %v81
    %v305 = vunpack.c.l.b16 %v82
    %v306 = vunpack.c.l.b16 %v83
    %v307 = vunpack.c.l.b16 %v84
    %v308 = vunpack.c.l.b16 %v85
    %v309 = vunpack.c.l.b16 %v86
    %v310 = vunpack.c.l.b16 %v87
    %v311 = vunpack.c.l.b16 %v88
    %v312 = vunpack.c.l.b16 %v89
    %v313 = vunpack.c.l.b16 %v90
    %v314 = vunpack.c.l.b16 %v91
    %v315 = vunpack.c.l.b16 %v92
    %v316 = vunpack.c.l.b16 %v93
    %v317 = vunpack.c.l.b16 %v94
    %v318 = vpack.c.b16 %v303, %v302
    %v319 = vpack.c.b16 %v305, %v304
    %v320 = vpack.c.b16 %v307, %v306
    %v321 = vpack.c.b16 %v309, %v308
    %v322 = vpack.c.b16 %v311, %v310
    %v323 = vpack.c.b16 %v313, %v312
    %v324 = vpack.c.b16 %v315, %v314
    %v325 = vpack.c.b16 %v317, %v316
    %334 = vmatprep.subr.bf16.mxu0 0
    %335 = vmatpush1.bf16.msra.mxu0 %v318
    %336 = vmatprep.subr.bf16.mxu0 0
    %337 = vmatpush1.bf16.msra.mxu0 %v319
    %338 = vmatprep.subr.bf16.mxu0 0
    %339 = vmatpush1.bf16.msra.mxu0 %v320
    %340 = vmatprep.subr.bf16.mxu0 0
    %341 = vmatpush1.bf16.msra.mxu0 %v321
    %342 = vmatprep.subr.bf16.mxu0 0
    %343 = vmatpush1.bf16.msra.mxu0 %v322
    %344 = vmatprep.subr.bf16.mxu0 0
    %345 = vmatpush1.bf16.msra.mxu0 %v323
    %346 = vmatprep.subr.bf16.mxu0 0
    %347 = vmatpush1.bf16.msra.mxu0 %v324
    %348 = vmatprep.subr.bf16.mxu0 0
    %349 = vmatpush1.bf16.msra.mxu0 %v325
    %350 = vmatprep.subr.bf16.mxu0 0
    %351 = vmatpush1.bf16.msra.mxu0 0
    %352 = vmatprep.subr.bf16.mxu0 0
    %353 = vmatpush1.bf16.msra.mxu0 0
    %354 = vmatprep.subr.bf16.mxu0 0
    %355 = vmatpush1.bf16.msra.mxu0 0
    %356 = vmatprep.subr.bf16.mxu0 0
    %357 = vmatpush1.bf16.msra.mxu0 0
    %358 = vmatprep.subr.bf16.mxu0 0
    %359 = vmatpush1.bf16.msra.mxu0 0
    %360 = vmatprep.subr.bf16.mxu0 0
    %361 = vmatpush1.bf16.msra.mxu0 0
    %362 = vmatprep.subr.bf16.mxu0 0
    %363 = vmatpush1.bf16.msra.mxu0 0
    %364 = vmatprep.subr.bf16.mxu0 0
    %365 = vmatpush1.bf16.msra.mxu0 0
    %366 = vmatprep.mubr.bf16.mxu0 0
    %367 = vmatmul.mubr.bf16.gmra.mrb[0].mxu0 %v279
    %v368 = vpop.f32.mrb[0].mxu0
    %v369 = vadd.f32 %v284, %v368
    %v370 = vpop.f32.mrb[0].mxu0
    %v371 = vpop.f32.mrb[0].mxu0
    %v372 = vpop.f32.mrb[0].mxu0
    %373 = vdwg.mxu0
    %v374 = vmax.f32 %v369, 0.0
    %v375 = vpack.c.bf16 %v374, %v374
    %v377 = vlaneseq
    %v378 = vshrl.u32 %v377, 7
    %v379 = vsub.s32 0, %v378
    %v380 = vrot.slane %v129, %v379
    %v398 = vunpack.c.l.b16 %v95
    %v399 = vunpack.c.l.b16 %v96
    %v400 = vunpack.c.l.b16 %v97
    %v401 = vunpack.c.l.b16 %v98
    %v402 = vunpack.c.l.b16 %v99
    %v403 = vunpack.c.l.b16 %v100
    %v404 = vunpack.c.l.b16 %v101
    %v405 = vunpack.c.l.b16 %v102
    %v406 = vunpack.c.l.b16 %v103
    %v407 = vunpack.c.l.b16 %v104
    %v408 = vunpack.c.l.b16 %v105
    %v409 = vunpack.c.l.b16 %v106
    %v410 = vunpack.c.l.b16 %v107
    %v411 = vunpack.c.l.b16 %v108
    %v412 = vunpack.c.l.b16 %v109
    %v413 = vunpack.c.l.b16 %v110
    %v414 = vpack.c.b16 %v399, %v398
    %v415 = vpack.c.b16 %v401, %v400
    %v416 = vpack.c.b16 %v403, %v402
    %v417 = vpack.c.b16 %v405, %v404
    %v418 = vpack.c.b16 %v407, %v406
    %v419 = vpack.c.b16 %v409, %v408
    %v420 = vpack.c.b16 %v411, %v410
    %v421 = vpack.c.b16 %v413, %v412
    %430 = vmatprep.subr.bf16.mxu0 0
    %431 = vmatpush1.bf16.msra.mxu0 %v414
    %432 = vmatprep.subr.bf16.mxu0 0
    %433 = vmatpush1.bf16.msra.mxu0 %v415
    %434 = vmatprep.subr.bf16.mxu0 0
    %435 = vmatpush1.bf16.msra.mxu0 %v416
    %436 = vmatprep.subr.bf16.mxu0 0
    %437 = vmatpush1.bf16.msra.mxu0 %v417
    %438 = vmatprep.subr.bf16.mxu0 0
    %439 = vmatpush1.bf16.msra.mxu0 %v418
    %440 = vmatprep.subr.bf16.mxu0 0
    %441 = vmatpush1.bf16.msra.mxu0 %v419
    %442 = vmatprep.subr.bf16.mxu0 0
    %443 = vmatpush1.bf16.msra.mxu0 %v420
    %444 = vmatprep.subr.bf16.mxu0 0
    %445 = vmatpush1.bf16.msra.mxu0 %v421
    %446 = vmatprep.subr.bf16.mxu0 0
    %447 = vmatpush1.bf16.msra.mxu0 0
    %448 = vmatprep.subr.bf16.mxu0 0
    %449 = vmatpush1.bf16.msra.mxu0 0
    %450 = vmatprep.subr.bf16.mxu0 0
    %451 = vmatpush1.bf16.msra.mxu0 0
    %452 = vmatprep.subr.bf16.mxu0 0
    %453 = vmatpush1.bf16.msra.mxu0 0
    %454 = vmatprep.subr.bf16.mxu0 0
    %455 = vmatpush1.bf16.msra.mxu0 0
    %456 = vmatprep.subr.bf16.mxu0 0
    %457 = vmatpush1.bf16.msra.mxu0 0
    %458 = vmatprep.subr.bf16.mxu0 0
    %459 = vmatpush1.bf16.msra.mxu0 0
    %460 = vmatprep.subr.bf16.mxu0 0
    %461 = vmatpush1.bf16.msra.mxu0 0
    %462 = vmatprep.mubr.bf16.mxu0 0
    %463 = vmatmul.mubr.bf16.gmra.mrb[0].mxu0 %v375
    %v464 = vpop.f32.mrb[0].mxu0
    %v465 = vadd.f32 %v380, %v464
    %v466 = vpop.f32.mrb[0].mxu0
    %v467 = vpop.f32.mrb[0].mxu0
    %v468 = vpop.f32.mrb[0].mxu0
    %469 = vdwg.mxu0
    %v470 = vmax.f32 %v465, 0.0
    %v471 = vpack.c.bf16 %v470, %v470
    %v473 = vlaneseq
    %v474 = vshrl.u32 %v473, 7
    %v475 = vsub.s32 0, %v474
    %v476 = vrot.slane %v130, %v475
    %v494 = vunpack.c.l.b16 %v111
    %v495 = vunpack.c.l.b16 %v112
    %v496 = vunpack.c.l.b16 %v113
    %v497 = vunpack.c.l.b16 %v114
    %v498 = vunpack.c.l.b16 %v115
    %v499 = vunpack.c.l.b16 %v116
    %v500 = vunpack.c.l.b16 %v117
    %v501 = vunpack.c.l.b16 %v118
    %v502 = vunpack.c.l.b16 %v119
    %v503 = vunpack.c.l.b16 %v120
    %v504 = vunpack.c.l.b16 %v121
    %v505 = vunpack.c.l.b16 %v122
    %v506 = vunpack.c.l.b16 %v123
    %v507 = vunpack.c.l.b16 %v124
    %v508 = vunpack.c.l.b16 %v125
    %v509 = vunpack.c.l.b16 %v126
    %v510 = vpack.c.b16 %v495, %v494
    %v511 = vpack.c.b16 %v497, %v496
    %v512 = vpack.c.b16 %v499, %v498
    %v513 = vpack.c.b16 %v501, %v500
    %v514 = vpack.c.b16 %v503, %v502
    %v515 = vpack.c.b16 %v505, %v504
    %v516 = vpack.c.b16 %v507, %v506
    %v517 = vpack.c.b16 %v509, %v508
    %526 = vmatprep.subr.bf16.mxu0 0
    %527 = vmatpush1.bf16.msra.mxu0 %v510
    %528 = vmatprep.subr.bf16.mxu0 0
    %529 = vmatpush1.bf16.msra.mxu0 %v511
    %530 = vmatprep.subr.bf16.mxu0 0
    %531 = vmatpush1.bf16.msra.mxu0 %v512
    %532 = vmatprep.subr.bf16.mxu0 0
    %533 = vmatpush1.bf16.msra.mxu0 %v513
    %534 = vmatprep.subr.bf16.mxu0 0
    %535 = vmatpush1.bf16.msra.mxu0 %v514
    %536 = vmatprep.subr.bf16.mxu0 0
    %537 = vmatpush1.bf16.msra.mxu0 %v515
    %538 = vmatprep.subr.bf16.mxu0 0
    %539 = vmatpush1.bf16.msra.mxu0 %v516
    %540 = vmatprep.subr.bf16.mxu0 0
    %541 = vmatpush1.bf16.msra.mxu0 %v517
    %542 = vmatprep.subr.bf16.mxu0 0
    %543 = vmatpush1.bf16.msra.mxu0 0
    %544 = vmatprep.subr.bf16.mxu0 0
    %545 = vmatpush1.bf16.msra.mxu0 0
    %546 = vmatprep.subr.bf16.mxu0 0
    %547 = vmatpush1.bf16.msra.mxu0 0
    %548 = vmatprep.subr.bf16.mxu0 0
    %549 = vmatpush1.bf16.msra.mxu0 0
    %550 = vmatprep.subr.bf16.mxu0 0
    %551 = vmatpush1.bf16.msra.mxu0 0
    %552 = vmatprep.subr.bf16.mxu0 0
    %553 = vmatpush1.bf16.msra.mxu0 0
    %554 = vmatprep.subr.bf16.mxu0 0
    %555 = vmatpush1.bf16.msra.mxu0 0
    %556 = vmatprep.subr.bf16.mxu0 0
    %557 = vmatpush1.bf16.msra.mxu0 0
    %558 = vmatprep.mubr.bf16.mxu0 0
    %559 = vmatmul.mubr.bf16.gmra.mrb[0].mxu0 %v471
    %v560 = vpop.f32.mrb[0].mxu0
    %v561 = vadd.f32 %v476, %v560
    %v562 = vpop.f32.mrb[0].mxu0
    %v563 = vpop.f32.mrb[0].mxu0
    %v564 = vpop.f32.mrb[0].mxu0
    %565 = vdwg.mxu0
    %v566 = vmax.f32 %v561, 0.0
    %v567 = vpack.c.bf16 %v566, %v566
    %v568 = vld [vmem:[#allocation5] sm:$0xff]
    %v569 = vld [vmem:[#allocation5 + $0x8] sm:$0xf]
    %v570 = vld [vmem:[#allocation5 + $0xc] sm:$0xff]
    %v571 = vld [vmem:[#allocation5 + $0x14] sm:$0xf]
    %v572 = vld [vmem:[#allocation5 + $0x18] sm:$0xff]
    %v573 = vld [vmem:[#allocation5 + $0x20] sm:$0xf]
    %v574 = vld [vmem:[#allocation5 + $0x24] sm:$0xff]
    %v575 = vld [vmem:[#allocation5 + $0x2c] sm:$0xf]
    %v576 = vld [vmem:[#allocation5 + $0x30] sm:$0xff]
    %v577 = vld [vmem:[#allocation5 + $0x38] sm:$0xf]
    %v578 = vld [vmem:[#allocation5 + $0x3c] sm:$0xff]
    %v579 = vld [vmem:[#allocation5 + $0x44] sm:$0xf]
    %v580 = vld [vmem:[#allocation5 + $0x48] sm:$0xff]
    %v581 = vld [vmem:[#allocation5 + $0x50] sm:$0xf]
    %v582 = vld [vmem:[#allocation5 + $0x54] sm:$0xff]
    %v583 = vld [vmem:[#allocation5 + $0x5c] sm:$0xf]
    %v584 = vld [vmem:[#allocation5 + $0x60] sm:$0xff]
    %v585 = vld [vmem:[#allocation5 + $0x68] sm:$0xf]
    %v586 = vld [vmem:[#allocation5 + $0x6c] sm:$0xff]
    %v587 = vld [vmem:[#allocation5 + $0x74] sm:$0xf]
    %v588 = vld [vmem:[#allocation5 + $0x78] sm:$0xff]
    %v589 = vld [vmem:[#allocation5 + $0x80] sm:$0xf]
    %v590 = vld [vmem:[#allocation5 + $0x84] sm:$0xff]
    %v591 = vld [vmem:[#allocation5 + $0x8c] sm:$0xf]
    %v592 = vld [vmem:[#allocation5 + $0x90] sm:$0xff]
    %v593 = vld [vmem:[#allocation5 + $0x98] sm:$0xf]
    %v594 = vld [vmem:[#allocation5 + $0x9c] sm:$0xff]
    %v595 = vld [vmem:[#allocation5 + $0xa4] sm:$0xf]
    %v596 = vld [vmem:[#allocation5 + $0xa8] sm:$0xff]
    %v597 = vld [vmem:[#allocation5 + $0xb0] sm:$0xf]
    %v598 = vld [vmem:[#allocation5 + $0xb4] sm:$0xff]
    %v599 = vld [vmem:[#allocation5 + $0xbc] sm:$0xf]
    %v601 = vlaneseq
    %v602 = vshrl.u32 %v601, 7
    %v603 = vsub.s32 0, %v602
    %v604 = vrot.slane %v131, %v603
    %v605 = vlaneseq
    %v606 = vshrl.u32 %v605, 7
    %v607 = vsub.s32 1, %v606
    %v608 = vrot.slane %v131, %v607
    %v609 = vlaneseq
    %v610 = vshrl.u32 %v609, 7
    %v611 = vsub.s32 2, %v610
    %v612 = vrot.slane %v131, %v611
    %v648 = vunpack.c.l.b16 %v568
    %v649 = vunpack.c.h.b16 %v568
    %v650 = vunpack.c.l.b16 %v569
    %v651 = vunpack.c.l.b16 %v570
    %v652 = vunpack.c.h.b16 %v570
    %v653 = vunpack.c.l.b16 %v571
    %v654 = vunpack.c.l.b16 %v572
    %v655 = vunpack.c.h.b16 %v572
    %v656 = vunpack.c.l.b16 %v573
    %v657 = vunpack.c.l.b16 %v574
    %v658 = vunpack.c.h.b16 %v574
    %v659 = vunpack.c.l.b16 %v575
    %v660 = vunpack.c.l.b16 %v576
    %v661 = vunpack.c.h.b16 %v576
    %v662 = vunpack.c.l.b16 %v577
    %v663 = vunpack.c.l.b16 %v578
    %v664 = vunpack.c.h.b16 %v578
    %v665 = vunpack.c.l.b16 %v579
    %v666 = vunpack.c.l.b16 %v580
    %v667 = vunpack.c.h.b16 %v580
    %v668 = vunpack.c.l.b16 %v581
    %v669 = vunpack.c.l.b16 %v582
    %v670 = vunpack.c.h.b16 %v582
    %v671 = vunpack.c.l.b16 %v583
    %v672 = vunpack.c.l.b16 %v584
    %v673 = vunpack.c.h.b16 %v584
    %v674 = vunpack.c.l.b16 %v585
    %v675 = vunpack.c.l.b16 %v586
    %v676 = vunpack.c.h.b16 %v586
    %v677 = vunpack.c.l.b16 %v587
    %v678 = vunpack.c.l.b16 %v588
    %v679 = vunpack.c.h.b16 %v588
    %v680 = vunpack.c.l.b16 %v589
    %v681 = vunpack.c.l.b16 %v590
    %v682 = vunpack.c.h.b16 %v590
    %v683 = vunpack.c.l.b16 %v591
    %v684 = vunpack.c.l.b16 %v592
    %v685 = vunpack.c.h.b16 %v592
    %v686 = vunpack.c.l.b16 %v593
    %v687 = vunpack.c.l.b16 %v594
    %v688 = vunpack.c.h.b16 %v594
    %v689 = vunpack.c.l.b16 %v595
    %v690 = vunpack.c.l.b16 %v596
    %v691 = vunpack.c.h.b16 %v596
    %v692 = vunpack.c.l.b16 %v597
    %v693 = vunpack.c.l.b16 %v598
    %v694 = vunpack.c.h.b16 %v598
    %v695 = vunpack.c.l.b16 %v599
    %v696 = vpack.c.b16 %v651, %v648
    %v697 = vpack.c.b16 %v652, %v649
    %v698 = vpack.c.b16 %v653, %v650
    %v699 = vpack.c.b16 %v657, %v654
    %v700 = vpack.c.b16 %v658, %v655
    %v701 = vpack.c.b16 %v659, %v656
    %v702 = vpack.c.b16 %v663, %v660
    %v703 = vpack.c.b16 %v664, %v661
    %v704 = vpack.c.b16 %v665, %v662
    %v705 = vpack.c.b16 %v669, %v666
    %v706 = vpack.c.b16 %v670, %v667
    %v707 = vpack.c.b16 %v671, %v668
    %v708 = vpack.c.b16 %v675, %v672
    %v709 = vpack.c.b16 %v676, %v673
    %v710 = vpack.c.b16 %v677, %v674
    %v711 = vpack.c.b16 %v681, %v678
    %v712 = vpack.c.b16 %v682, %v679
    %v713 = vpack.c.b16 %v683, %v680
    %v714 = vpack.c.b16 %v687, %v684
    %v715 = vpack.c.b16 %v688, %v685
    %v716 = vpack.c.b16 %v689, %v686
    %v717 = vpack.c.b16 %v693, %v690
    %v718 = vpack.c.b16 %v694, %v691
    %v719 = vpack.c.b16 %v695, %v692
    %744 = vmatprep.subr.bf16.mxu0 %v697
    %745 = vmatpush1.bf16.msra.mxu0 %v696
    %746 = vmatprep.subr.bf16.mxu0 %v700
    %747 = vmatpush1.bf16.msra.mxu0 %v699
    %748 = vmatprep.subr.bf16.mxu0 %v703
    %749 = vmatpush1.bf16.msra.mxu0 %v702
    %750 = vmatprep.subr.bf16.mxu0 %v706
    %751 = vmatpush1.bf16.msra.mxu0 %v705
    %752 = vmatprep.subr.bf16.mxu0 %v709
    %753 = vmatpush1.bf16.msra.mxu0 %v708
    %754 = vmatprep.subr.bf16.mxu0 %v712
    %755 = vmatpush1.bf16.msra.mxu0 %v711
    %756 = vmatprep.subr.bf16.mxu0 %v715
    %757 = vmatpush1.bf16.msra.mxu0 %v714
    %758 = vmatprep.subr.bf16.mxu0 %v718
    %759 = vmatpush1.bf16.msra.mxu0 %v717
    %760 = vmatprep.subr.bf16.mxu0 0
    %761 = vmatpush1.bf16.msra.mxu0 0
    %762 = vmatprep.subr.bf16.mxu0 0
    %763 = vmatpush1.bf16.msra.mxu0 0
    %764 = vmatprep.subr.bf16.mxu0 0
    %765 = vmatpush1.bf16.msra.mxu0 0
    %766 = vmatprep.subr.bf16.mxu0 0
    %767 = vmatpush1.bf16.msra.mxu0 0
    %768 = vmatprep.subr.bf16.mxu0 0
    %769 = vmatpush1.bf16.msra.mxu0 0
    %770 = vmatprep.subr.bf16.mxu0 0
    %771 = vmatpush1.bf16.msra.mxu0 0
    %772 = vmatprep.subr.bf16.mxu0 0
    %773 = vmatpush1.bf16.msra.mxu0 0
    %774 = vmatprep.subr.bf16.mxu0 0
    %775 = vmatpush1.bf16.msra.mxu0 0
    %776 = vmatprep.mubr.bf16.mxu0 0
    %777 = vmatmul.mubr.bf16.gmra.mrb[0].mxu0 %v567
    %v778 = vpop.f32.mrb[0].mxu0
    %v779 = vadd.f32 %v604, %v778
    %v780 = vpop.f32.mrb[0].mxu0
    %v781 = vadd.f32 %v608, %v780
    %v782 = vpop.f32.mrb[0].mxu0
    %v783 = vpop.f32.mrb[0].mxu0
    %784 = vdwg.mxu0
    %785 = vmatprep.subr.bf16.mxu0 0
    %786 = vmatpush1.bf16.msra.mxu0 %v698
    %787 = vmatprep.subr.bf16.mxu0 0
    %788 = vmatpush1.bf16.msra.mxu0 %v701
    %789 = vmatprep.subr.bf16.mxu0 0
    %790 = vmatpush1.bf16.msra.mxu0 %v704
    %791 = vmatprep.subr.bf16.mxu0 0
    %792 = vmatpush1.bf16.msra.mxu0 %v707
    %793 = vmatprep.subr.bf16.mxu0 0
    %794 = vmatpush1.bf16.msra.mxu0 %v710
    %795 = vmatprep.subr.bf16.mxu0 0
    %796 = vmatpush1.bf16.msra.mxu0 %v713
    %797 = vmatprep.subr.bf16.mxu0 0
    %798 = vmatpush1.bf16.msra.mxu0 %v716
    %799 = vmatprep.subr.bf16.mxu0 0
    %800 = vmatpush1.bf16.msra.mxu0 %v719
    %801 = vmatprep.subr.bf16.mxu0 0
    %802 = vmatpush1.bf16.msra.mxu0 0
    %803 = vmatprep.subr.bf16.mxu0 0
    %804 = vmatpush1.bf16.msra.mxu0 0
    %805 = vmatprep.subr.bf16.mxu0 0
    %806 = vmatpush1.bf16.msra.mxu0 0
    %807 = vmatprep.subr.bf16.mxu0 0
    %808 = vmatpush1.bf16.msra.mxu0 0
    %809 = vmatprep.subr.bf16.mxu0 0
    %810 = vmatpush1.bf16.msra.mxu0 0
    %811 = vmatprep.subr.bf16.mxu0 0
    %812 = vmatpush1.bf16.msra.mxu0 0
    %813 = vmatprep.subr.bf16.mxu0 0
    %814 = vmatpush1.bf16.msra.mxu0 0
    %815 = vmatprep.subr.bf16.mxu0 0
    %816 = vmatpush1.bf16.msra.mxu0 0
    %817 = vmatprep.mubr.bf16.mxu0 0
    %818 = vmatmul.mubr.bf16.gmra.mrb[0].mxu0 %v567
    %v819 = vpop.f32.mrb[0].mxu0
    %v820 = vadd.f32 %v612, %v819
    %v821 = vpop.f32.mrb[0].mxu0
    %v822 = vpop.f32.mrb[0].mxu0
    %v823 = vpop.f32.mrb[0].mxu0
    %824 = vdwg.mxu0
    %825 = vst [vmem:[#allocation7] sm:$0xff] %v779
    %826 = vst [vmem:[#allocation7 + $0x8] sm:$0xff] %v781
    %827 = vst [vmem:[#allocation7 + $0x10] sm:$0xff] %v820
    // Predicated region
    $region26: #{regression_forward.1} parent=1 // pred_check
      _
    $region27: #{regression_forward.1} parent=1 // pred_check_branch
      %829 = sbr.rel (0) target = $region29
    $region28: #{regression_forward.1} parent=1 // pred_region
      %s831 = ssub.s32 384, 384
      %832 = vsyncadd [#allocation4], %s831
      %s834 = sshll.u32 [#allocation7], 4
      %s835 = int_to_ptr.vmem [resolvable:$true] %s834
      %837 = dma.vmem_to_hbm [thread:$0]  %s835, 384, %s4, [#allocation4]
    $region29: #{regression_forward.1} parent=1 // pred_fallthru
      _
    // Predicated region
    $region30: #{regression_forward.1} parent=1 // pred_check
      _
    $region31: #{regression_forward.1} parent=1 // pred_check_branch
      %839 = sbr.rel (0) target = $region33
    $region32: #{regression_forward.1} parent=1 // pred_region
      %840 = dma.done [#allocation4], 384
    $region33: #{regression_forward.1} parent=1 // pred_fallthru
      _
    %841 = vsyncpa [#allocation3], 1
    %842 = vsyncpa [#allocation6], 1
    %843 = vsyncpa [#allocation4], 1

</llo_original>
